<compile_context>
chip_gen: v7x
topology: tpu7x:2x2x1
jax: 0.10.0
libtpu: 0.0.40
codegen_flags: <defaults>
</compile_context>

<pallas_src>
import functools

import jax
import jax.numpy as jnp
import numpy as np
from jax.experimental import pallas as pl
from jax.experimental.pallas import tpu as pltpu


def _sublane_pack(dtype):
    """Sublane packing: 8 rows for 4-byte, 16 for 2-byte, 32 for 1-byte dtypes."""
    return 8 * max(1, 4 // jnp.dtype(dtype).itemsize)


def _vmem_capacity_bytes():
    """Generation-aware VMEM capacity (128 MiB v5e/v6e, 64 MiB per TC on v7x)."""
    try:
        return int(pltpu.get_tpu_info().vmem_capacity_bytes)
    except Exception:
        return 64 * 2 ** 20  # safe lower bound across generations


def _row_partial(x):
    """(ch, rows, L) f32 -> (k, L) partial sums.

    rows sublane-aligned -> pure VPU vector adds (k == 8);
    otherwise            -> one (hidden) sublane reduction (k == 1).
    """
    ch, rows, L = x.shape
    if rows % 8 == 0:
        return x.reshape(ch * rows // 8, 8, L).sum(axis=0)
    return jnp.sum(jnp.sum(x, axis=0), axis=0, keepdims=True)


def _chan_partial(x):
    """(C, rows, L) f32 -> (C, k, L) per-channel partial sums."""
    c, rows, L = x.shape
    if rows % 8 == 0:
        return x.reshape(c, rows // 8, 8, L).sum(axis=1)
    return jnp.sum(x, axis=1, keepdims=True)


def _voxelmorph_kernel(y_true_ref, y_pred_ref, flow_ref, *rest, use_seg):
    if use_seg:
        st_ref, sp_ref, mse_ref, grad_ref, seg_ref, carry_ref = rest
    else:
        mse_ref, grad_ref, carry_ref = rest
        st_ref = sp_ref = seg_ref = None

    h = pl.program_id(2)

    # ---- per-(split, batch) accumulator init at the first row tile -----------
    @pl.when(h == 0)
    def _():
        mse_ref[...] = jnp.zeros_like(mse_ref)
        grad_ref[...] = jnp.zeros_like(grad_ref)
        if use_seg:
            seg_ref[...] = jnp.zeros_like(seg_ref)

    # ---- MSE partial: VPU adds into the resident (8, L) accumulator ----------
    yt = y_true_ref[...].astype(jnp.float32)
    yp = y_pred_ref[...].astype(jnp.float32)
    p = _row_partial((yt - yp) ** 2)
    mse_ref[0:p.shape[0], :] = mse_ref[0:p.shape[0], :] + p

    # ---- flow smoothness: flow block read once, both gradients from it -------
    f = flow_ref[...].astype(jnp.float32)              # (Cf, th, W)
    _, th, w = f.shape

    dx = f[:, :, 1:] - f[:, :, :-1]                    # gradient along W (lanes)
    px = _row_partial(dx * dx)
    grad_ref[0:px.shape[0], 0:w - 1] = grad_ref[0:px.shape[0], 0:w - 1] + px

    dy = f[:, 1:, :] - f[:, :-1, :]                    # gradient along H, in-tile
    py = _row_partial(dy * dy)
    grad_ref[8:8 + py.shape[0], :] = grad_ref[8:8 + py.shape[0], :] + py

    # cross-tile H gradient; only computed where it exists (skipped at h == 0)
    @pl.when(h > 0)
    def _():
        db = f[:, 0:1, :] - carry_ref[...]             # (Cf, 1, W)
        pc = jnp.sum(db * db, axis=0)                  # (1, W), vector adds
        grad_ref[15:16, :] = grad_ref[15:16, :] + pc

    carry_ref[...] = f[:, th - 1:th, :]

    # ---- soft-Dice partials, vectorised over seg channels --------------------
    if use_seg:
        cs = seg_ref.shape[0] // 2
        st = st_ref[...].astype(jnp.float32)           # (Cs, rows, L)
        sp = sp_ref[...].astype(jnp.float32)
        pi = _chan_partial(st * sp)                    # (Cs, kk, L)
        pu = _chan_partial(st + sp)
        kk = pi.shape[1]
        seg_ref[0:cs, 0:kk, :] = seg_ref[0:cs, 0:kk, :] + pi
        seg_ref[cs:2 * cs, 0:kk, :] = seg_ref[cs:2 * cs, 0:kk, :] + pu


def _pick_tile_h(h_rows, bytes_per_row, sub, tile_h, budget):
    """Largest tile (multiple of `sub`, dividing h_rows) under the VMEM budget."""
    if tile_h is not None:
        if h_rows % tile_h != 0 or not (tile_h % sub == 0 or tile_h == h_rows):
            raise ValueError(
                f"tile_h={tile_h} must divide {h_rows} rows and be a multiple "
                f"of the sublane pack {sub} (or equal the full extent)")
        return tile_h
    target = max(sub, budget // max(1, bytes_per_row))
    if h_rows <= target:
        return h_rows
    t = (min(h_rows, target) // sub) * sub
    while t >= sub:
        if h_rows % t == 0:
            return t
        t -= sub
    # TODO(synk): H has no sublane-aligned divisor under the VMEM budget; fall
    # back to a single full-height tile.
    return h_rows


def _run_loss_kernel(y_true, y_pred, flow, seg_t, seg_p, tile_h, n_split):
    B, C, H, W = y_true.shape
    Cf = flow.shape[1]
    use_seg = seg_t is not None
    Cs = seg_t.shape[1] if use_seg else 0

    vmem_cap = _vmem_capacity_bytes()
    sub_data = _sublane_pack(y_true.dtype)
    if use_seg:
        sub_data = max(sub_data, _sublane_pack(seg_t.dtype))
    sub = max(sub_data, _sublane_pack(flow.dtype))

    h_rows = H // n_split
    stream_bytes_per_row = 2 * W * (          # x2: double-buffered input blocks
        2 * C * y_true.dtype.itemsize + Cf * flow.dtype.itemsize
        + (2 * Cs * seg_t.dtype.itemsize if use_seg else 0))
    th = _pick_tile_h(h_rows, stream_bytes_per_row, sub, tile_h,
                      budget=int(vmem_cap * 0.6))
    n_h = h_rows // th

    # Lane-dense layout for the purely element-wise streams when W is not a
    # multiple of 128 (row-major reshape is free wrapper-side).  Flow keeps its
    # native layout because the spatial gradients need it.
    hw_total = (H * W) // 128
    hw_tile = (th * W) // 128 if (th * W) % 128 == 0 else 0
    lane_dense = (W % 128 != 0 and hw_tile > 0
                  and (hw_tile % sub_data == 0 or hw_tile == hw_total))

    if lane_dense:
        Lm, rows_tile = 128, hw_tile
        yt_in = y_true.reshape(B, C, hw_total, 128)
        yp_in = y_pred.reshape(B, C, hw_total, 128)
        st_in = seg_t.reshape(B, Cs, hw_total, 128) if use_seg else None
        sp_in = seg_p.reshape(B, Cs, hw_total, 128) if use_seg else None
    else:
        Lm, rows_tile = W, th
        yt_in, yp_in, st_in, sp_in = y_true, y_pred, seg_t, seg_p

    def data_spec(ch):
        return pl.BlockSpec((None, ch, rows_tile, Lm),
                            lambda s, b, h: (b, 0, s * n_h + h, 0))

    flow_spec = pl.BlockSpec((None, Cf, th, W),
                             lambda s, b, h: (b, 0, s * n_h + h, 0))

    in_specs = [data_spec(C), data_spec(C), flow_spec]
    args = [yt_in, yp_in, flow]
    if use_seg:
        in_specs += [data_spec(Cs), data_spec(Cs)]
        args += [st_in, sp_in]

    # Resident per-(split, batch) vector accumulators (written to HBM once each).
    out_shapes = [jax.ShapeDtypeStruct((n_split, B, 8, Lm), jnp.float32),
                  jax.ShapeDtypeStruct((n_split, B, 16, W), jnp.float32)]
    out_specs = [pl.BlockSpec((None, None, 8, Lm), lambda s, b, h: (s, b, 0, 0)),
                 pl.BlockSpec((None, None, 16, W), lambda s, b, h: (s, b, 0, 0))]
    if use_seg:
        out_shapes.append(
            jax.ShapeDtypeStruct((n_split, B, 2 * Cs, 8, Lm), jnp.float32))
        out_specs.append(pl.BlockSpec((None, None, 2 * Cs, 8, Lm),
                                      lambda s, b, h: (s, b, 0, 0, 0)))

    grid_spec = pltpu.PrefetchScalarGridSpec(
        num_scalar_prefetch=0,
        grid=(n_split, B, n_h),
        in_specs=in_specs,
        out_specs=out_specs,
        scratch_shapes=[pltpu.VMEM((Cf, 1, W), jnp.float32)],   # dy carry row
    )

    kernel = functools.partial(_voxelmorph_kernel, use_seg=use_seg)
    return pl.pallas_call(
        kernel,
        out_shape=tuple(out_shapes),
        grid_spec=grid_spec,
        compiler_params=pltpu.CompilerParams(
            dimension_semantics=("parallel", "parallel", "arbitrary"),
            vmem_limit_bytes=int(min(vmem_cap * 0.85, vmem_cap - (4 << 20))),
        ),
    )(*args)


class VoxelMorphLossPallas:
    """Pallas VoxelMorphLoss with the canonical VoxelMorph sub-losses:
       data_loss = MSE + grad_weight * Grad_l2(flow);  seg_loss = -soft_Dice."""

    def __init__(self, grad_weight=0.01, seg_weight=0.01, use_seg=True,
                 tile_h=None, n_split=None):
        self.grad_weight = float(grad_weight)
        self.seg_weight = float(seg_weight)
        self.use_seg = use_seg
        self.tile_h = tile_h
        self.n_split = n_split

    def __call__(self, y_true, y_pred, flow, y_seg_true=None, y_seg_pred=None):
        B, C, H, W = y_true.shape
        Cf = flow.shape[1]
        use_seg = self.use_seg and (y_seg_true is not None)
        seg_t = y_seg_true if use_seg else None
        seg_p = y_seg_pred if use_seg else None
        Cs = seg_t.shape[1] if use_seg else 0

        sub = max(_sublane_pack(y_true.dtype), _sublane_pack(flow.dtype),
                  _sublane_pack(seg_t.dtype) if use_seg else 8)
        n_split = self.n_split
        if n_split is None:
            # Give v7x's second TensorCore parallel work when the batch alone
            # cannot balance the megacore split; costs nothing on 1-TC chips.
            n_split = 2 if (B % 2 == 1 and H % (2 * sub) == 0) else 1
        if n_split < 1 or H % n_split != 0 or (
                n_split > 1 and (H // n_split) % sub != 0):
            n_split = 1

        outs = _run_loss_kernel(y_true, y_pred, flow, seg_t, seg_p,
                                self.tile_h, n_split)
        mse_out, grad_out = outs[0], outs[1]

        # -- cheap scalar glue in plain JAX (tiny arrays) -----------------------
        sse = jnp.sum(mse_out)
        sdx = jnp.sum(grad_out[:, :, 0:8, :])
        sdy = jnp.sum(grad_out[:, :, 8:16, :])
        for s in range(1, n_split):            # dy seam rows between H-splits
            r = s * (H // n_split)
            d = (flow[:, :, r, :].astype(jnp.float32)
                 - flow[:, :, r - 1, :].astype(jnp.float32))
            sdy = sdy + jnp.sum(d * d)

        mse = sse / float(B * C * H * W)
        grad = (sdx / float(B * Cf * H * (W - 1)) +
                sdy / float(B * Cf * (H - 1) * W)) / 2.0
        data_loss = mse + self.grad_weight * grad
        if not use_seg:
            return data_loss

        su = jnp.sum(outs[2], axis=(0, 3, 4))           # (B, 2*Cs)
        inter, union = su[:, :Cs], su[:, Cs:]
        dice = jnp.mean(2.0 * inter / jnp.maximum(union, 1e-5))
        return data_loss + self.seg_weight * (-dice)


def _reference_loss(y_true, y_pred, flow, y_seg_true=None, y_seg_pred=None,
                    grad_weight=0.01, seg_weight=0.01):
    """Pure-JAX reference mirroring the PyTorch semantics."""
    mse = jnp.mean((y_true - y_pred) ** 2)
    dy = flow[:, :, 1:, :] - flow[:, :, :-1, :]
    dx = flow[:, :, :, 1:] - flow[:, :, :, :-1]
    grad = (jnp.mean(dx * dx) + jnp.mean(dy * dy)) / 2.0
    data_loss = mse + grad_weight * grad
    if y_seg_true is None:
        return data_loss
    B, C = y_seg_true.shape[:2]
    t = y_seg_true.reshape(B, C, -1)
    p = y_seg_pred.reshape(B, C, -1)
    top = 2.0 * jnp.sum(t * p, axis=-1)
    bottom = jnp.maximum(jnp.sum(t + p, axis=-1), 1e-5)
    dice = jnp.mean(top / bottom)
    return data_loss + seg_weight * (-dice)


if __name__ == "__main__":
    key = jax.random.PRNGKey(0)
    k0, k1, k2, k3, k4 = jax.random.split(key, 5)

    B, C, H, W = 2, 1, 16, 16
    y_true = jax.random.uniform(k0, (B, C, H, W), jnp.float32)
    y_pred = jax.random.uniform(k1, (B, C, H, W), jnp.float32)
    flow = 0.1 * jax.random.normal(k2, (B, 2, H, W), jnp.float32)
    y_seg_true = (jax.random.uniform(k3, (B, 1, H, W)) > 0.5).astype(jnp.float32)
    y_seg_pred = jax.random.uniform(k4, (B, 1, H, W), jnp.float32)

    # 1) multi-tile reduction path (tile_h=8 -> 2 row tiles): exercises the
    #    cross-tile dy carry and the resident output accumulators.
    loss_fn = VoxelMorphLossPallas(grad_weight=0.01, seg_weight=0.01,
                                   use_seg=True, tile_h=8)
    loss = jax.block_until_ready(loss_fn(y_true, y_pred, flow,
                                         y_seg_true, y_seg_pred))
    ref = _reference_loss(y_true, y_pred, flow, y_seg_true, y_seg_pred)
    np.testing.assert_allclose(np.asarray(loss), np.asarray(ref),
                               rtol=1e-5, atol=1e-6)

    # 2) auto tiling + lane-dense layout + native bf16 inputs (upcast in-kernel).
    bf = lambda a: a.astype(jnp.bfloat16)
    f32 = lambda a: a.astype(jnp.float32)
    loss_fn_auto = VoxelMorphLossPallas(grad_weight=0.01, seg_weight=0.01,
                                        use_seg=True)
    loss_bf16 = jax.block_until_ready(
        loss_fn_auto(bf(y_true), bf(y_pred), bf(flow),
                     bf(y_seg_true), bf(y_seg_pred)))
    ref_bf16 = _reference_loss(f32(bf(y_true)), f32(bf(y_pred)), f32(bf(flow)),
                               f32(bf(y_seg_true)), f32(bf(y_seg_pred)))
    np.testing.assert_allclose(np.asarray(loss_bf16), np.asarray(ref_bf16),
                               rtol=1e-5, atol=1e-6)

    # 3) data-loss-only variant: smaller kernel with no seg streams at all.
    loss_fn_ns = VoxelMorphLossPallas(grad_weight=0.01, use_seg=False, tile_h=8)
    loss_ns = jax.block_until_ready(loss_fn_ns(y_true, y_pred, flow))
    ref_ns = _reference_loss(y_true, y_pred, flow)
    np.testing.assert_allclose(np.asarray(loss_ns), np.asarray(ref_ns),
                               rtol=1e-5, atol=1e-6)

    # 4) odd batch -> automatic H-split (second parallel axis) + wrapper seam fix.
    loss_fn_odd = VoxelMorphLossPallas(grad_weight=0.01, seg_weight=0.01,
                                       use_seg=True)
    loss_odd = jax.block_until_ready(
        loss_fn_odd(y_true[:1], y_pred[:1], flow[:1],
                    y_seg_true[:1], y_seg_pred[:1]))
    ref_odd = _reference_loss(y_true[:1], y_pred[:1], flow[:1],
                              y_seg_true[:1], y_seg_pred[:1])
    np.testing.assert_allclose(np.asarray(loss_odd), np.asarray(ref_odd),
                               rtol=1e-5, atol=1e-6)

    print("KERNEL_OK")
</pallas_src>

<mosaic_0001>
module attributes {stable_mosaic.version = 11 : i64} {
  func.func @_voxelmorph_kernel(%arg0: i32, %arg1: i32, %arg2: i32, %arg3: memref<1x1x8x16xf32, #tpu.memory_space<vmem>>, %arg4: memref<1x1x8x16xf32, #tpu.memory_space<vmem>>, %arg5: memref<1x2x8x16xf32, #tpu.memory_space<vmem>>, %arg6: memref<1x1x8x16xf32, #tpu.memory_space<vmem>>, %arg7: memref<1x1x8x16xf32, #tpu.memory_space<vmem>>, %arg8: memref<1x1x8x16xf32, #tpu.memory_space<vmem>>, %arg9: memref<1x1x16x16xf32, #tpu.memory_space<vmem>>, %arg10: memref<1x1x2x8x16xf32, #tpu.memory_space<vmem>>, %arg11: memref<2x1x16xf32, #tpu.memory_space<vmem>>) attributes {dimension_semantics = [#tpu.dimension_semantics<parallel>, #tpu.dimension_semantics<parallel>, #tpu.dimension_semantics<arbitrary>], iteration_bounds = array<i64: 1, 2, 2>, scalar_prefetch = 0 : i64, scratch_operands = 1 : i64, tpu.core_type = #tpu.core_type<tc>, window_params = [{transform_indices = @transform_0, window_bounds = array<i64: 1, 1, 8, 16>}, {transform_indices = @transform_1, window_bounds = array<i64: 1, 1, 8, 16>}, {transform_indices = @transform_2, window_bounds = array<i64: 1, 2, 8, 16>}, {transform_indices = @transform_3, window_bounds = array<i64: 1, 1, 8, 16>}, {transform_indices = @transform_4, window_bounds = array<i64: 1, 1, 8, 16>}, {transform_indices = @transform_5, window_bounds = array<i64: 1, 1, 8, 16>}, {transform_indices = @transform_6, window_bounds = array<i64: 1, 1, 16, 16>}, {transform_indices = @transform_7, window_bounds = array<i64: 1, 1, 2, 8, 16>}]} {
    %c0_i32 = arith.constant 0 : i32
    %0 = arith.cmpi eq, %arg2, %c0_i32 : i32
    %1 = arith.extui %0 : i1 to i32
    %c0_i32_0 = arith.constant 0 : i32
    %2 = arith.cmpi ne, %1, %c0_i32_0 : i32
    scf.if %2 {
      %cst_72 = arith.constant 0.000000e+00 : f32
      %69 = vector.broadcast %cst_72 : f32 to vector<8x16xf32>
      %c0_73 = arith.constant 0 : index
      %c0_74 = arith.constant 0 : index
      %c0_75 = arith.constant 0 : index
      %c0_76 = arith.constant 0 : index
      %70 = vector.load %arg8[%c0_73, %c0_74, %c0_75, %c0_76] : memref<1x1x8x16xf32, #tpu.memory_space<vmem>>, vector<1x1x8x16xf32>
      %71 = vector.shape_cast %70 : vector<1x1x8x16xf32> to vector<8x16xf32>
      %72 = vector.shape_cast %69 : vector<8x16xf32> to vector<1x1x8x16xf32>
      tpu.vector_store %arg8[%c0_73, %c0_74, %c0_75, %c0_76], %72 {strides = array<i32>} : memref<1x1x8x16xf32, #tpu.memory_space<vmem>>, vector<1x1x8x16xf32>,
      %cst_77 = arith.constant 0.000000e+00 : f32
      %73 = vector.broadcast %cst_77 : f32 to vector<16x16xf32>
      %c0_78 = arith.constant 0 : index
      %c0_79 = arith.constant 0 : index
      %c0_80 = arith.constant 0 : index
      %c0_81 = arith.constant 0 : index
      %74 = vector.load %arg9[%c0_78, %c0_79, %c0_80, %c0_81] : memref<1x1x16x16xf32, #tpu.memory_space<vmem>>, vector<1x1x16x16xf32>
      %75 = vector.shape_cast %74 : vector<1x1x16x16xf32> to vector<16x16xf32>
      %76 = vector.shape_cast %73 : vector<16x16xf32> to vector<1x1x16x16xf32>
      tpu.vector_store %arg9[%c0_78, %c0_79, %c0_80, %c0_81], %76 {strides = array<i32>} : memref<1x1x16x16xf32, #tpu.memory_space<vmem>>, vector<1x1x16x16xf32>,
      %cst_82 = arith.constant 0.000000e+00 : f32
      %77 = vector.broadcast %cst_82 : f32 to vector<2x8x16xf32>
      %c0_83 = arith.constant 0 : index
      %c0_84 = arith.constant 0 : index
      %c0_85 = arith.constant 0 : index
      %c0_86 = arith.constant 0 : index
      %c0_87 = arith.constant 0 : index
      %78 = vector.load %arg10[%c0_83, %c0_84, %c0_85, %c0_86, %c0_87] : memref<1x1x2x8x16xf32, #tpu.memory_space<vmem>>, vector<1x1x2x8x16xf32>
      %79 = vector.shape_cast %78 : vector<1x1x2x8x16xf32> to vector<2x8x16xf32>
      %80 = vector.shape_cast %77 : vector<2x8x16xf32> to vector<1x1x2x8x16xf32>
      tpu.vector_store %arg10[%c0_83, %c0_84, %c0_85, %c0_86, %c0_87], %80 {strides = array<i32>} : memref<1x1x2x8x16xf32, #tpu.memory_space<vmem>>, vector<1x1x2x8x16xf32>,
    } else {
    }
    %c0 = arith.constant 0 : index
    %c0_1 = arith.constant 0 : index
    %c0_2 = arith.constant 0 : index
    %c0_3 = arith.constant 0 : index
    %3 = vector.load %arg3[%c0, %c0_1, %c0_2, %c0_3] : memref<1x1x8x16xf32, #tpu.memory_space<vmem>>, vector<1x1x8x16xf32>
    %4 = vector.shape_cast %3 : vector<1x1x8x16xf32> to vector<1x8x16xf32>
    %c0_4 = arith.constant 0 : index
    %c0_5 = arith.constant 0 : index
    %c0_6 = arith.constant 0 : index
    %c0_7 = arith.constant 0 : index
    %5 = vector.load %arg4[%c0_4, %c0_5, %c0_6, %c0_7] : memref<1x1x8x16xf32, #tpu.memory_space<vmem>>, vector<1x1x8x16xf32>
    %6 = vector.shape_cast %5 : vector<1x1x8x16xf32> to vector<1x8x16xf32>
    %7 = arith.subf %4, %6 : vector<1x8x16xf32>
    %8 = arith.mulf %7, %7 : vector<1x8x16xf32>
    %cst = arith.constant dense<0.000000e+00> : vector<8x16xf32>
    %9 = vector.multi_reduction <add>, %8, %cst [0] : vector<1x8x16xf32> to vector<8x16xf32>
    %c0_8 = arith.constant 0 : index
    %c0_9 = arith.constant 0 : index
    %c0_10 = arith.constant 0 : index
    %c0_11 = arith.constant 0 : index
    %10 = vector.load %arg8[%c0_8, %c0_9, %c0_10, %c0_11] : memref<1x1x8x16xf32, #tpu.memory_space<vmem>>, vector<1x1x8x16xf32>
    %11 = vector.shape_cast %10 : vector<1x1x8x16xf32> to vector<8x16xf32>
    %12 = arith.addf %11, %9 : vector<8x16xf32>
    %c0_12 = arith.constant 0 : index
    %c0_13 = arith.constant 0 : index
    %c0_14 = arith.constant 0 : index
    %c0_15 = arith.constant 0 : index
    %13 = vector.load %arg8[%c0_12, %c0_13, %c0_14, %c0_15] : memref<1x1x8x16xf32, #tpu.memory_space<vmem>>, vector<1x1x8x16xf32>
    %14 = vector.shape_cast %13 : vector<1x1x8x16xf32> to vector<8x16xf32>
    %15 = vector.shape_cast %12 : vector<8x16xf32> to vector<1x1x8x16xf32>
    tpu.vector_store %arg8[%c0_12, %c0_13, %c0_14, %c0_15], %15 {strides = array<i32>} : memref<1x1x8x16xf32, #tpu.memory_space<vmem>>, vector<1x1x8x16xf32>,
    %c0_16 = arith.constant 0 : index
    %c0_17 = arith.constant 0 : index
    %c0_18 = arith.constant 0 : index
    %c0_19 = arith.constant 0 : index
    %16 = vector.load %arg5[%c0_16, %c0_17, %c0_18, %c0_19] : memref<1x2x8x16xf32, #tpu.memory_space<vmem>>, vector<1x2x8x16xf32>
    %17 = vector.shape_cast %16 : vector<1x2x8x16xf32> to vector<2x8x16xf32>
    %18 = vector.extract_strided_slice %17 {offsets = [0, 0, 1], sizes = [2, 8, 15], strides = [1, 1, 1]} : vector<2x8x16xf32> to vector<2x8x15xf32>
    %19 = vector.extract_strided_slice %17 {offsets = [0, 0, 0], sizes = [2, 8, 15], strides = [1, 1, 1]} : vector<2x8x16xf32> to vector<2x8x15xf32>
    %20 = arith.subf %18, %19 : vector<2x8x15xf32>
    %21 = arith.mulf %20, %20 : vector<2x8x15xf32>
    %cst_20 = arith.constant dense<0.000000e+00> : vector<8x15xf32>
    %22 = vector.multi_reduction <add>, %21, %cst_20 [0] : vector<2x8x15xf32> to vector<8x15xf32>
    %c0_21 = arith.constant 0 : index
    %c0_22 = arith.constant 0 : index
    %c0_23 = arith.constant 0 : index
    %c0_24 = arith.constant 0 : index
    %23 = vector.load %arg9[%c0_21, %c0_22, %c0_23, %c0_24] : memref<1x1x16x16xf32, #tpu.memory_space<vmem>>, vector<1x1x8x15xf32>
    %24 = vector.shape_cast %23 : vector<1x1x8x15xf32> to vector<8x15xf32>
    %25 = arith.addf %24, %22 : vector<8x15xf32>
    %c0_25 = arith.constant 0 : index
    %c0_26 = arith.constant 0 : index
    %c0_27 = arith.constant 0 : index
    %c0_28 = arith.constant 0 : index
    %26 = vector.load %arg9[%c0_25, %c0_26, %c0_27, %c0_28] : memref<1x1x16x16xf32, #tpu.memory_space<vmem>>, vector<1x1x8x15xf32>
    %27 = vector.shape_cast %26 : vector<1x1x8x15xf32> to vector<8x15xf32>
    %28 = vector.shape_cast %25 : vector<8x15xf32> to vector<1x1x8x15xf32>
    tpu.vector_store %arg9[%c0_25, %c0_26, %c0_27, %c0_28], %28 {strides = array<i32>} : memref<1x1x16x16xf32, #tpu.memory_space<vmem>>, vector<1x1x8x15xf32>,
    %29 = vector.extract_strided_slice %17 {offsets = [0, 1, 0], sizes = [2, 7, 16], strides = [1, 1, 1]} : vector<2x8x16xf32> to vector<2x7x16xf32>
    %30 = vector.extract_strided_slice %17 {offsets = [0, 0, 0], sizes = [2, 7, 16], strides = [1, 1, 1]} : vector<2x8x16xf32> to vector<2x7x16xf32>
    %31 = arith.subf %29, %30 : vector<2x7x16xf32>
    %32 = arith.mulf %31, %31 : vector<2x7x16xf32>
    %cst_29 = arith.constant dense<0.000000e+00> : vector<7x16xf32>
    %33 = vector.multi_reduction <add>, %32, %cst_29 [0] : vector<2x7x16xf32> to vector<7x16xf32>
    %cst_30 = arith.constant dense<0.000000e+00> : vector<16xf32>
    %34 = vector.multi_reduction <add>, %33, %cst_30 [0] : vector<7x16xf32> to vector<16xf32>
    %35 = vector.shape_cast %34 : vector<16xf32> to vector<1x16xf32>
    %c0_31 = arith.constant 0 : index
    %c0_32 = arith.constant 0 : index
    %c8 = arith.constant 8 : index
    %c0_33 = arith.constant 0 : index
    %36 = vector.load %arg9[%c0_31, %c0_32, %c8, %c0_33] : memref<1x1x16x16xf32, #tpu.memory_space<vmem>>, vector<1x1x1x16xf32>
    %37 = vector.shape_cast %36 : vector<1x1x1x16xf32> to vector<1x16xf32>
    %38 = arith.addf %37, %35 : vector<1x16xf32>
    %c0_34 = arith.constant 0 : index
    %c0_35 = arith.constant 0 : index
    %c8_36 = arith.constant 8 : index
    %c0_37 = arith.constant 0 : index
    %39 = vector.load %arg9[%c0_34, %c0_35, %c8_36, %c0_37] : memref<1x1x16x16xf32, #tpu.memory_space<vmem>>, vector<1x1x1x16xf32>
    %40 = vector.shape_cast %39 : vector<1x1x1x16xf32> to vector<1x16xf32>
    %41 = vector.shape_cast %38 : vector<1x16xf32> to vector<1x1x1x16xf32>
    tpu.vector_store %arg9[%c0_34, %c0_35, %c8_36, %c0_37], %41 {strides = array<i32>} : memref<1x1x16x16xf32, #tpu.memory_space<vmem>>, vector<1x1x1x16xf32>,
    %c0_i32_38 = arith.constant 0 : i32
    %42 = arith.cmpi sgt, %arg2, %c0_i32_38 : i32
    %43 = arith.extui %42 : i1 to i32
    %c0_i32_39 = arith.constant 0 : i32
    %44 = arith.cmpi ne, %43, %c0_i32_39 : i32
    scf.if %44 {
      %69 = vector.extract_strided_slice %17 {offsets = [0, 0, 0], sizes = [2, 1, 16], strides = [1, 1, 1]} : vector<2x8x16xf32> to vector<2x1x16xf32>
      %c0_72 = arith.constant 0 : index
      %c0_73 = arith.constant 0 : index
      %c0_74 = arith.constant 0 : index
      %70 = vector.load %arg11[%c0_72, %c0_73, %c0_74] : memref<2x1x16xf32, #tpu.memory_space<vmem>>, vector<2x1x16xf32>
      %71 = arith.subf %69, %70 : vector<2x1x16xf32>
      %72 = arith.mulf %71, %71 : vector<2x1x16xf32>
      %cst_75 = arith.constant dense<0.000000e+00> : vector<1x16xf32>
      %73 = vector.multi_reduction <add>, %72, %cst_75 [0] : vector<2x1x16xf32> to vector<1x16xf32>
      %c0_76 = arith.constant 0 : index
      %c0_77 = arith.constant 0 : index
      %c15 = arith.constant 15 : index
      %c0_78 = arith.constant 0 : index
      %74 = vector.load %arg9[%c0_76, %c0_77, %c15, %c0_78] : memref<1x1x16x16xf32, #tpu.memory_space<vmem>>, vector<1x1x1x16xf32>
      %75 = vector.shape_cast %74 : vector<1x1x1x16xf32> to vector<1x16xf32>
      %76 = arith.addf %75, %73 : vector<1x16xf32>
      %c0_79 = arith.constant 0 : index
      %c0_80 = arith.constant 0 : index
      %c15_81 = arith.constant 15 : index
      %c0_82 = arith.constant 0 : index
      %77 = vector.load %arg9[%c0_79, %c0_80, %c15_81, %c0_82] : memref<1x1x16x16xf32, #tpu.memory_space<vmem>>, vector<1x1x1x16xf32>
      %78 = vector.shape_cast %77 : vector<1x1x1x16xf32> to vector<1x16xf32>
      %79 = vector.shape_cast %76 : vector<1x16xf32> to vector<1x1x1x16xf32>
      tpu.vector_store %arg9[%c0_79, %c0_80, %c15_81, %c0_82], %79 {strides = array<i32>} : memref<1x1x16x16xf32, #tpu.memory_space<vmem>>, vector<1x1x1x16xf32>,
    } else {
    }
    %45 = vector.extract_strided_slice %17 {offsets = [0, 7, 0], sizes = [2, 1, 16], strides = [1, 1, 1]} : vector<2x8x16xf32> to vector<2x1x16xf32>
    %c0_40 = arith.constant 0 : index
    %c0_41 = arith.constant 0 : index
    %c0_42 = arith.constant 0 : index
    %46 = vector.load %arg11[%c0_40, %c0_41, %c0_42] : memref<2x1x16xf32, #tpu.memory_space<vmem>>, vector<2x1x16xf32>
    tpu.vector_store %arg11[%c0_40, %c0_41, %c0_42], %45 {strides = array<i32>} : memref<2x1x16xf32, #tpu.memory_space<vmem>>, vector<2x1x16xf32>,
    %c0_43 = arith.constant 0 : index
    %c0_44 = arith.constant 0 : index
    %c0_45 = arith.constant 0 : index
    %c0_46 = arith.constant 0 : index
    %47 = vector.load %arg6[%c0_43, %c0_44, %c0_45, %c0_46] : memref<1x1x8x16xf32, #tpu.memory_space<vmem>>, vector<1x1x8x16xf32>
    %48 = vector.shape_cast %47 : vector<1x1x8x16xf32> to vector<1x8x16xf32>
    %c0_47 = arith.constant 0 : index
    %c0_48 = arith.constant 0 : index
    %c0_49 = arith.constant 0 : index
    %c0_50 = arith.constant 0 : index
    %49 = vector.load %arg7[%c0_47, %c0_48, %c0_49, %c0_50] : memref<1x1x8x16xf32, #tpu.memory_space<vmem>>, vector<1x1x8x16xf32>
    %50 = vector.shape_cast %49 : vector<1x1x8x16xf32> to vector<1x8x16xf32>
    %51 = arith.mulf %48, %50 : vector<1x8x16xf32>
    %52 = vector.shape_cast %51 : vector<1x8x16xf32> to vector<1x1x8x16xf32>
    %cst_51 = arith.constant dense<0.000000e+00> : vector<1x8x16xf32>
    %53 = vector.multi_reduction <add>, %52, %cst_51 [1] : vector<1x1x8x16xf32> to vector<1x8x16xf32>
    %54 = arith.addf %48, %50 : vector<1x8x16xf32>
    %55 = vector.shape_cast %54 : vector<1x8x16xf32> to vector<1x1x8x16xf32>
    %cst_52 = arith.constant dense<0.000000e+00> : vector<1x8x16xf32>
    %56 = vector.multi_reduction <add>, %55, %cst_52 [1] : vector<1x1x8x16xf32> to vector<1x8x16xf32>
    %c0_53 = arith.constant 0 : index
    %c0_54 = arith.constant 0 : index
    %c0_55 = arith.constant 0 : index
    %c0_56 = arith.constant 0 : index
    %c0_57 = arith.constant 0 : index
    %57 = vector.load %arg10[%c0_53, %c0_54, %c0_55, %c0_56, %c0_57] : memref<1x1x2x8x16xf32, #tpu.memory_space<vmem>>, vector<1x1x1x8x16xf32>
    %58 = vector.shape_cast %57 : vector<1x1x1x8x16xf32> to vector<1x8x16xf32>
    %59 = arith.addf %58, %53 : vector<1x8x16xf32>
    %c0_58 = arith.constant 0 : index
    %c0_59 = arith.constant 0 : index
    %c0_60 = arith.constant 0 : index
    %c0_61 = arith.constant 0 : index
    %c0_62 = arith.constant 0 : index
    %60 = vector.load %arg10[%c0_58, %c0_59, %c0_60, %c0_61, %c0_62] : memref<1x1x2x8x16xf32, #tpu.memory_space<vmem>>, vector<1x1x1x8x16xf32>
    %61 = vector.shape_cast %60 : vector<1x1x1x8x16xf32> to vector<1x8x16xf32>
    %62 = vector.shape_cast %59 : vector<1x8x16xf32> to vector<1x1x1x8x16xf32>
    tpu.vector_store %arg10[%c0_58, %c0_59, %c0_60, %c0_61, %c0_62], %62 {strides = array<i32>} : memref<1x1x2x8x16xf32, #tpu.memory_space<vmem>>, vector<1x1x1x8x16xf32>,
    %c0_63 = arith.constant 0 : index
    %c0_64 = arith.constant 0 : index
    %c1 = arith.constant 1 : index
    %c0_65 = arith.constant 0 : index
    %c0_66 = arith.constant 0 : index
    %63 = vector.load %arg10[%c0_63, %c0_64, %c1, %c0_65, %c0_66] : memref<1x1x2x8x16xf32, #tpu.memory_space<vmem>>, vector<1x1x1x8x16xf32>
    %64 = vector.shape_cast %63 : vector<1x1x1x8x16xf32> to vector<1x8x16xf32>
    %65 = arith.addf %64, %56 : vector<1x8x16xf32>
    %c0_67 = arith.constant 0 : index
    %c0_68 = arith.constant 0 : index
    %c1_69 = arith.constant 1 : index
    %c0_70 = arith.constant 0 : index
    %c0_71 = arith.constant 0 : index
    %66 = vector.load %arg10[%c0_67, %c0_68, %c1_69, %c0_70, %c0_71] : memref<1x1x2x8x16xf32, #tpu.memory_space<vmem>>, vector<1x1x1x8x16xf32>
    %67 = vector.shape_cast %66 : vector<1x1x1x8x16xf32> to vector<1x8x16xf32>
    %68 = vector.shape_cast %65 : vector<1x8x16xf32> to vector<1x1x1x8x16xf32>
    tpu.vector_store %arg10[%c0_67, %c0_68, %c1_69, %c0_70, %c0_71], %68 {strides = array<i32>} : memref<1x1x2x8x16xf32, #tpu.memory_space<vmem>>, vector<1x1x1x8x16xf32>,
    return
  }
  func.func @transform_0(%arg0: i32, %arg1: i32, %arg2: i32) -> (i32, i32, i32, i32) {
    %c2_i32 = arith.constant 2 : i32
    %0 = arith.muli %arg0, %c2_i32 : i32
    %1 = arith.addi %0, %arg2 : i32
    %c0_i32 = arith.constant 0 : i32
    %c0_i32_0 = arith.constant 0 : i32
    %c0_i32_1 = arith.constant 0 : i32
    return %arg1, %c0_i32, %1, %c0_i32_0 : i32, i32, i32, i32
  }
  func.func @transform_1(%arg0: i32, %arg1: i32, %arg2: i32) -> (i32, i32, i32, i32) {
    %c2_i32 = arith.constant 2 : i32
    %0 = arith.muli %arg0, %c2_i32 : i32
    %1 = arith.addi %0, %arg2 : i32
    %c0_i32 = arith.constant 0 : i32
    %c0_i32_0 = arith.constant 0 : i32
    %c0_i32_1 = arith.constant 0 : i32
    return %arg1, %c0_i32, %1, %c0_i32_0 : i32, i32, i32, i32
  }
  func.func @transform_2(%arg0: i32, %arg1: i32, %arg2: i32) -> (i32, i32, i32, i32) {
    %c2_i32 = arith.constant 2 : i32
    %0 = arith.muli %arg0, %c2_i32 : i32
    %1 = arith.addi %0, %arg2 : i32
    %c0_i32 = arith.constant 0 : i32
    %c0_i32_0 = arith.constant 0 : i32
    %c0_i32_1 = arith.constant 0 : i32
    return %arg1, %c0_i32, %1, %c0_i32_0 : i32, i32, i32, i32
  }
  func.func @transform_3(%arg0: i32, %arg1: i32, %arg2: i32) -> (i32, i32, i32, i32) {
    %c2_i32 = arith.constant 2 : i32
    %0 = arith.muli %arg0, %c2_i32 : i32
    %1 = arith.addi %0, %arg2 : i32
    %c0_i32 = arith.constant 0 : i32
    %c0_i32_0 = arith.constant 0 : i32
    %c0_i32_1 = arith.constant 0 : i32
    return %arg1, %c0_i32, %1, %c0_i32_0 : i32, i32, i32, i32
  }
  func.func @transform_4(%arg0: i32, %arg1: i32, %arg2: i32) -> (i32, i32, i32, i32) {
    %c2_i32 = arith.constant 2 : i32
    %0 = arith.muli %arg0, %c2_i32 : i32
    %1 = arith.addi %0, %arg2 : i32
    %c0_i32 = arith.constant 0 : i32
    %c0_i32_0 = arith.constant 0 : i32
    %c0_i32_1 = arith.constant 0 : i32
    return %arg1, %c0_i32, %1, %c0_i32_0 : i32, i32, i32, i32
  }
  func.func @transform_5(%arg0: i32, %arg1: i32, %arg2: i32) -> (i32, i32, i32, i32) {
    %c0_i32 = arith.constant 0 : i32
    %c0_i32_0 = arith.constant 0 : i32
    %c0_i32_1 = arith.constant 0 : i32
    return %arg0, %arg1, %c0_i32, %c0_i32_0 : i32, i32, i32, i32
  }
  func.func @transform_6(%arg0: i32, %arg1: i32, %arg2: i32) -> (i32, i32, i32, i32) {
    %c0_i32 = arith.constant 0 : i32
    %c0_i32_0 = arith.constant 0 : i32
    %c0_i32_1 = arith.constant 0 : i32
    return %arg0, %arg1, %c0_i32, %c0_i32_0 : i32, i32, i32, i32
  }
  func.func @transform_7(%arg0: i32, %arg1: i32, %arg2: i32) -> (i32, i32, i32, i32, i32) {
    %c0_i32 = arith.constant 0 : i32
    %c0_i32_0 = arith.constant 0 : i32
    %c0_i32_1 = arith.constant 0 : i32
    %c0_i32_2 = arith.constant 0 : i32
    return %arg0, %arg1, %c0_i32, %c0_i32_0, %c0_i32_1 : i32, i32, i32, i32, i32
  }
}

</mosaic_0001>

<llo_original>
// kernel: tpu_custom_call.1
$region0: #{tpu_custom_call.1}
  #allocation0 [shape = 'u32[]', space=smem, size = 0x4, offset = 0x4, fixed_abs, tag = 'smem constant byte address 0x4 - core index']
  #allocation1 [shape = 'u32[144,128]{1,0:T(1,128)}', space=vmem, size = 0x12000, scoped, tag = 'internal scratch']
  #allocation2 [shape = 'f32[2,1,16]{2,1,0:T(1,128)}', space=vmem, size = 0x400, scoped, tag = 'scratch operand']
  %s0 = inlined_call_operand.hbm [shape: f32[2,1,16,16], index: 0, kind: input, shape index: {}]
  %s1 = inlined_call_operand.hbm [shape: f32[2,1,16,16], index: 1, kind: input, shape index: {}]
  %s2 = inlined_call_operand.hbm [shape: f32[2,2,16,16], index: 2, kind: input, shape index: {}]
  %s3 = inlined_call_operand.hbm [shape: f32[2,1,16,16], index: 3, kind: input, shape index: {}]
  %s4 = inlined_call_operand.hbm [shape: f32[2,1,16,16], index: 4, kind: input, shape index: {}]
  %s5 = inlined_call_operand.hbm [shape: f32[1,2,8,16], index: 5, kind: output, shape index: {0}]
  %s6 = inlined_call_operand.hbm [shape: f32[1,2,16,16], index: 6, kind: output, shape index: {1}]
  %s7 = inlined_call_operand.hbm [shape: f32[1,2,2,8,16], index: 7, kind: output, shape index: {2}]
  %8 = xla_tuple %s5, %s6, %s7
  %s9 = sld [smem:[#allocation0]]
  $region97: #{tpu_custom_call.1} parent=0
    _
  %s11 = ssub.s32 1, %s9
  %s12 = scalar_select 0, %s11, %s9
  $region1: #{tpu_custom_call.1} parent=0
    #allocation3 [shape = 'u8[8192]{0}', space=vmem, size = 0x2000, scoped, tag = 'input window, operand 0']
    #allocation4 [shape = 's32[2]{0}', space=sflag, size = 0x8, scoped, tag = 'scoped memory for tpu_custom_call.1']
    #allocation5 [shape = 's32[2]{0}', space=sflag, size = 0x8, scoped, tag = 'scoped memory for tpu_custom_call.1']
    #allocation6 [shape = 'u8[8192]{0}', space=vmem, size = 0x2000, scoped, tag = 'input window, operand 1']
    #allocation7 [shape = 's32[2]{0}', space=sflag, size = 0x8, scoped, tag = 'scoped memory for tpu_custom_call.1']
    #allocation8 [shape = 'u8[16384]{0}', space=vmem, size = 0x4000, scoped, tag = 'input window, operand 2']
    #allocation9 [shape = 'u8[8192]{0}', space=vmem, size = 0x2000, scoped, tag = 'input window, operand 3']
    #allocation10 [shape = 's32[2]{0}', space=sflag, size = 0x8, scoped, tag = 'scoped memory for tpu_custom_call.1']
    #allocation11 [shape = 'u8[8192]{0}', space=vmem, size = 0x2000, scoped, tag = 'input window, operand 4']
    #allocation12 [shape = 'u8[8192]{0}', space=vmem, size = 0x2000, scoped, tag = 'output window, operand 0']
    #allocation13 [shape = 'u8[16384]{0}', space=vmem, size = 0x4000, scoped, tag = 'output window, operand 1']
    #allocation14 [shape = 's32[2]{0}', space=sflag, size = 0x8, scoped, tag = 'scoped memory for tpu_custom_call.1']
    #allocation15 [shape = 'u8[16384]{0}', space=vmem, size = 0x4000, scoped, tag = 'output window, operand 2']
    %13 = vsyncpa [#allocation4], 0
    %s14 = scalar_lea.sflag [#allocation4], 1
    %15 = vsyncpa %s14, 0
    %16 = vsyncpa [#allocation7], 0
    %s17 = scalar_lea.sflag [#allocation7], 1
    %18 = vsyncpa %s17, 0
    %19 = vsyncpa [#allocation10], 0
    %s20 = scalar_lea.sflag [#allocation10], 1
    %21 = vsyncpa %s20, 0
    %22 = vsyncpa [#allocation5], 0
    %s23 = scalar_lea.sflag [#allocation5], 1
    %24 = vsyncpa %s23, 0
    %25 = vsyncpa [#allocation14], 0
    %s26 = scalar_lea.sflag [#allocation14], 1
    %27 = vsyncpa %s26, 0
    loop: start=0, step=1, limit=6
    $region2: #{tpu_custom_call.1} parent=1 // loop_pre_header
      _
    $region3: #{tpu_custom_call.1} parent=1 // loop_header
      %s29 = sphi 0, %s33
      %p30 = scmp.ge.s32.totalorder %s29, 6
      %s36 = sphi 0, %s55
      %s37 = sphi 0, %s51
      %s38 = sphi 0, %s47
      %s39 = sphi 0, %s36
      %s40 = sphi 0, %s37
      %s41 = sphi 0, %s38
      %s42 = sphi 0, %s39
      %s43 = sphi 0, %s40
      %s44 = sphi 0, %s41
      %s64 = sphi 0, %s66
      %s67 = sphi 0, %s64
      %s68 = sphi 0, %s67
      %s84 = sphi 0, %s68
      %s96 = sphi 0, %s98
      %s99 = sphi 0, %s96
      %s100 = sphi 0, %s99
      %s116 = sphi 0, %s100
      %s128 = sphi 0, %s130
      %s131 = sphi 0, %s128
      %s132 = sphi 0, %s131
      %s148 = sphi 0, %s132
      %s160 = sphi 0, %s162
      %s163 = sphi 0, %s160
      %s164 = sphi 0, %s163
      %s180 = sphi 0, %s164
      %s192 = sphi 0, %s194
      %s195 = sphi 0, %s192
      %s196 = sphi 0, %s195
      %s212 = sphi 0, %s196
      %s220 = sphi 0, %s222
      %s223 = sphi 0, %s220
      %s224 = sphi 0, %s223
      %s240 = sphi 0, %s224
      %s248 = sphi 0, %s250
      %s251 = sphi 0, %s248
      %s252 = sphi 0, %s251
      %s268 = sphi 0, %s252
      %s276 = sphi 0, %s278
      %s279 = sphi 0, %s276
      %s280 = sphi 0, %s279
      %s296 = sphi 0, %s280
    $region4: #{tpu_custom_call.1} parent=1 // loop_header_branch
      %32 = sbr.rel (%p30) target = $region8
    $region5: #{tpu_custom_call.1} parent=1 // loop_body
      %s34 = ssub.s32 %s29, 1
      %s35 = ssub.s32 %s29, 2
      %s45 = sadd.s32 1, %s38
      %p46 = scmp.ge.s32.totalorder %s45, 2
      %s47 = scalar_select %p46, 0, %s45
      %s48 = sadd.s32 1, %s37
      %s49 = scalar_select %p46, %s48, %s37
      %p50 = scmp.ge.s32.totalorder %s49, 2
      %s51 = scalar_select %p50, 0, %s49
      %s52 = sadd.s32 1, %s36
      %s53 = scalar_select %p50, %s52, %s36
      %p54 = scmp.ge.s32.totalorder %s53, 1
      %s55 = scalar_select %p54, 0, %s53
      %s56 = smul.u32 %s36, 2
      %s57 = sadd.s32 %s56, %s38
      %s58 = smul.u32 %s55, 2
      %s59 = sadd.s32 %s58, %s47
      %s60 = ssub.s32 %s37, %s51
      %s61 = ssub.s32 %s57, %s59
      %s62 = sor.u32 %s60, %s61
      %p63 = scmp.eq.s32.totalorder %s62, 0
      %s65 = sadd.s32 %s64, 1
      %s66 = scalar_select %p63, %s64, %s65
      %p69 = pneg %p63
      %p70 = scmp.eq.s32.totalorder %s29, 3
      %p71 = por %p69, %p70
      %p72 = scmp.ne.s32.totalorder %s64, %s67
      %p73 = scmp.eq.s32.totalorder %s29, 0
      %p74 = por %p72, %p73
      %p75 = scmp.ne.s32.totalorder %s64, %s67
      %p76 = scmp.eq.s32.totalorder %s34, 3
      %p77 = por %p75, %p76
      %p78 = scmp.ne.s32.totalorder %s67, %s68
      %p79 = scmp.eq.s32.totalorder %s34, 0
      %p80 = por %p78, %p79
      %p81 = scmp.ne.s32.totalorder %s67, %s68
      %p82 = scmp.eq.s32.totalorder %s35, 3
      %p83 = por %p81, %p82
      %p85 = scmp.ne.s32.totalorder %s68, %s84
      %p86 = scmp.eq.s32.totalorder %s35, 0
      %p87 = por %p85, %p86
      %s88 = smul.u32 %s36, 2
      %s89 = sadd.s32 %s88, %s38
      %s90 = smul.u32 %s55, 2
      %s91 = sadd.s32 %s90, %s47
      %s92 = ssub.s32 %s37, %s51
      %s93 = ssub.s32 %s89, %s91
      %s94 = sor.u32 %s92, %s93
      %p95 = scmp.eq.s32.totalorder %s94, 0
      %s97 = sadd.s32 %s96, 1
      %s98 = scalar_select %p95, %s96, %s97
      %p101 = pneg %p95
      %p102 = scmp.eq.s32.totalorder %s29, 3
      %p103 = por %p101, %p102
      %p104 = scmp.ne.s32.totalorder %s96, %s99
      %p105 = scmp.eq.s32.totalorder %s29, 0
      %p106 = por %p104, %p105
      %p107 = scmp.ne.s32.totalorder %s96, %s99
      %p108 = scmp.eq.s32.totalorder %s34, 3
      %p109 = por %p107, %p108
      %p110 = scmp.ne.s32.totalorder %s99, %s100
      %p111 = scmp.eq.s32.totalorder %s34, 0
      %p112 = por %p110, %p111
      %p113 = scmp.ne.s32.totalorder %s99, %s100
      %p114 = scmp.eq.s32.totalorder %s35, 3
      %p115 = por %p113, %p114
      %p117 = scmp.ne.s32.totalorder %s100, %s116
      %p118 = scmp.eq.s32.totalorder %s35, 0
      %p119 = por %p117, %p118
      %s120 = smul.u32 %s36, 2
      %s121 = sadd.s32 %s120, %s38
      %s122 = smul.u32 %s55, 2
      %s123 = sadd.s32 %s122, %s47
      %s124 = ssub.s32 %s37, %s51
      %s125 = ssub.s32 %s121, %s123
      %s126 = sor.u32 %s124, %s125
      %p127 = scmp.eq.s32.totalorder %s126, 0
      %s129 = sadd.s32 %s128, 1
      %s130 = scalar_select %p127, %s128, %s129
      %p133 = pneg %p127
      %p134 = scmp.eq.s32.totalorder %s29, 3
      %p135 = por %p133, %p134
      %p136 = scmp.ne.s32.totalorder %s128, %s131
      %p137 = scmp.eq.s32.totalorder %s29, 0
      %p138 = por %p136, %p137
      %p139 = scmp.ne.s32.totalorder %s128, %s131
      %p140 = scmp.eq.s32.totalorder %s34, 3
      %p141 = por %p139, %p140
      %p142 = scmp.ne.s32.totalorder %s131, %s132
      %p143 = scmp.eq.s32.totalorder %s34, 0
      %p144 = por %p142, %p143
      %p145 = scmp.ne.s32.totalorder %s131, %s132
      %p146 = scmp.eq.s32.totalorder %s35, 3
      %p147 = por %p145, %p146
      %p149 = scmp.ne.s32.totalorder %s132, %s148
      %p150 = scmp.eq.s32.totalorder %s35, 0
      %p151 = por %p149, %p150
      %s152 = smul.u32 %s36, 2
      %s153 = sadd.s32 %s152, %s38
      %s154 = smul.u32 %s55, 2
      %s155 = sadd.s32 %s154, %s47
      %s156 = ssub.s32 %s37, %s51
      %s157 = ssub.s32 %s153, %s155
      %s158 = sor.u32 %s156, %s157
      %p159 = scmp.eq.s32.totalorder %s158, 0
      %s161 = sadd.s32 %s160, 1
      %s162 = scalar_select %p159, %s160, %s161
      %p165 = pneg %p159
      %p166 = scmp.eq.s32.totalorder %s29, 3
      %p167 = por %p165, %p166
      %p168 = scmp.ne.s32.totalorder %s160, %s163
      %p169 = scmp.eq.s32.totalorder %s29, 0
      %p170 = por %p168, %p169
      %p171 = scmp.ne.s32.totalorder %s160, %s163
      %p172 = scmp.eq.s32.totalorder %s34, 3
      %p173 = por %p171, %p172
      %p174 = scmp.ne.s32.totalorder %s163, %s164
      %p175 = scmp.eq.s32.totalorder %s34, 0
      %p176 = por %p174, %p175
      %p177 = scmp.ne.s32.totalorder %s163, %s164
      %p178 = scmp.eq.s32.totalorder %s35, 3
      %p179 = por %p177, %p178
      %p181 = scmp.ne.s32.totalorder %s164, %s180
      %p182 = scmp.eq.s32.totalorder %s35, 0
      %p183 = por %p181, %p182
      %s184 = smul.u32 %s36, 2
      %s185 = sadd.s32 %s184, %s38
      %s186 = smul.u32 %s55, 2
      %s187 = sadd.s32 %s186, %s47
      %s188 = ssub.s32 %s37, %s51
      %s189 = ssub.s32 %s185, %s187
      %s190 = sor.u32 %s188, %s189
      %p191 = scmp.eq.s32.totalorder %s190, 0
      %s193 = sadd.s32 %s192, 1
      %s194 = scalar_select %p191, %s192, %s193
      %p197 = pneg %p191
      %p198 = scmp.eq.s32.totalorder %s29, 3
      %p199 = por %p197, %p198
      %p200 = scmp.ne.s32.totalorder %s192, %s195
      %p201 = scmp.eq.s32.totalorder %s29, 0
      %p202 = por %p200, %p201
      %p203 = scmp.ne.s32.totalorder %s192, %s195
      %p204 = scmp.eq.s32.totalorder %s34, 3
      %p205 = por %p203, %p204
      %p206 = scmp.ne.s32.totalorder %s195, %s196
      %p207 = scmp.eq.s32.totalorder %s34, 0
      %p208 = por %p206, %p207
      %p209 = scmp.ne.s32.totalorder %s195, %s196
      %p210 = scmp.eq.s32.totalorder %s35, 3
      %p211 = por %p209, %p210
      %p213 = scmp.ne.s32.totalorder %s196, %s212
      %p214 = scmp.eq.s32.totalorder %s35, 0
      %p215 = por %p213, %p214
      %s216 = ssub.s32 %s36, %s55
      %s217 = ssub.s32 %s37, %s51
      %s218 = sor.u32 %s216, %s217
      %p219 = scmp.eq.s32.totalorder %s218, 0
      %s221 = sadd.s32 %s220, 1
      %s222 = scalar_select %p219, %s220, %s221
      %p225 = pneg %p219
      %p226 = scmp.eq.s32.totalorder %s29, 3
      %p227 = por %p225, %p226
      %p228 = scmp.ne.s32.totalorder %s220, %s223
      %p229 = scmp.eq.s32.totalorder %s29, 0
      %p230 = por %p228, %p229
      %p231 = scmp.ne.s32.totalorder %s220, %s223
      %p232 = scmp.eq.s32.totalorder %s34, 3
      %p233 = por %p231, %p232
      %p234 = scmp.ne.s32.totalorder %s223, %s224
      %p235 = scmp.eq.s32.totalorder %s34, 0
      %p236 = por %p234, %p235
      %p237 = scmp.ne.s32.totalorder %s223, %s224
      %p238 = scmp.eq.s32.totalorder %s35, 3
      %p239 = por %p237, %p238
      %p241 = scmp.ne.s32.totalorder %s224, %s240
      %p242 = scmp.eq.s32.totalorder %s35, 0
      %p243 = por %p241, %p242
      %s244 = ssub.s32 %s36, %s55
      %s245 = ssub.s32 %s37, %s51
      %s246 = sor.u32 %s244, %s245
      %p247 = scmp.eq.s32.totalorder %s246, 0
      %s249 = sadd.s32 %s248, 1
      %s250 = scalar_select %p247, %s248, %s249
      %p253 = pneg %p247
      %p254 = scmp.eq.s32.totalorder %s29, 3
      %p255 = por %p253, %p254
      %p256 = scmp.ne.s32.totalorder %s248, %s251
      %p257 = scmp.eq.s32.totalorder %s29, 0
      %p258 = por %p256, %p257
      %p259 = scmp.ne.s32.totalorder %s248, %s251
      %p260 = scmp.eq.s32.totalorder %s34, 3
      %p261 = por %p259, %p260
      %p262 = scmp.ne.s32.totalorder %s251, %s252
      %p263 = scmp.eq.s32.totalorder %s34, 0
      %p264 = por %p262, %p263
      %p265 = scmp.ne.s32.totalorder %s251, %s252
      %p266 = scmp.eq.s32.totalorder %s35, 3
      %p267 = por %p265, %p266
      %p269 = scmp.ne.s32.totalorder %s252, %s268
      %p270 = scmp.eq.s32.totalorder %s35, 0
      %p271 = por %p269, %p270
      %s272 = ssub.s32 %s36, %s55
      %s273 = ssub.s32 %s37, %s51
      %s274 = sor.u32 %s272, %s273
      %p275 = scmp.eq.s32.totalorder %s274, 0
      %s277 = sadd.s32 %s276, 1
      %s278 = scalar_select %p275, %s276, %s277
      %p281 = pneg %p275
      %p282 = scmp.eq.s32.totalorder %s29, 3
      %p283 = por %p281, %p282
      %p284 = scmp.ne.s32.totalorder %s276, %s279
      %p285 = scmp.eq.s32.totalorder %s29, 0
      %p286 = por %p284, %p285
      %p287 = scmp.ne.s32.totalorder %s276, %s279
      %p288 = scmp.eq.s32.totalorder %s34, 3
      %p289 = por %p287, %p288
      %p290 = scmp.ne.s32.totalorder %s279, %s280
      %p291 = scmp.eq.s32.totalorder %s34, 0
      %p292 = por %p290, %p291
      %p293 = scmp.ne.s32.totalorder %s279, %s280
      %p294 = scmp.eq.s32.totalorder %s35, 3
      %p295 = por %p293, %p294
      %p297 = scmp.ne.s32.totalorder %s280, %s296
      %p298 = scmp.eq.s32.totalorder %s35, 0
      %p299 = por %p297, %p298
      %p300 = scmp.le.s32.totalorder 1, %s29
      %p301 = scmp.lt.s32.totalorder %s29, 5
      %p302 = pnand %p300, %p301
      %p303 = pneg %p302
      // Predicated region
      $region9: #{tpu_custom_call.1} parent=5 // pred_check
        _
      $region10: #{tpu_custom_call.1} parent=5 // pred_check_branch
        %305 = sbr.rel (%p302) target = $region12
      $region11: #{tpu_custom_call.1} parent=5 // pred_region
        %s306 = ssub.s32 %s29, 1
      $region12: #{tpu_custom_call.1} parent=5 // pred_fallthru
        _
      %p307 = scmp.lt.s32.totalorder %s29, 4
      // Predicated region
      $region13: #{tpu_custom_call.1} parent=5 // pred_check
        %p308 = pneg %p307
      $region14: #{tpu_custom_call.1} parent=5 // pred_check_branch
        %310 = sbr.rel (%p308) target = $region16
      $region15: #{tpu_custom_call.1} parent=5 // pred_region
        // Predicated region
        $region17: #{tpu_custom_call.1} parent=15 // pred_check
          %p311 = pneg %p74
        $region18: #{tpu_custom_call.1} parent=15 // pred_check_branch
          %313 = sbr.rel (%p311) target = $region20
        $region19: #{tpu_custom_call.1} parent=15 // pred_region
          %s314 = sand.u32 %s64, 1
          %s315 = scalar_lea.sflag [#allocation4], %s314
          %s316 = sand.u32 %s64, 1
          %s317 = smul.addr %s316, 8
          %s318 = scalar_lea.vmem [#allocation3], %s317
          %s319 = smul.u32 %s36, 2
          %s320 = sadd.s32 %s319, %s38
          %s322 = ssub.s32 128, 128
          %323 = vsyncadd %s315, %s322
          %s324 = smul.addr %s37, 2
          %s325 = sadd.s32 %s320, %s324
          %s326 = smul.addr %s325, 128
          %s327 = scalar_lea.hbm %s0, %s326
          %s329 = sshll.u32 %s318, 4
          %s330 = int_to_ptr.vmem [resolvable:$true] %s329
          %332 = dma.hbm_to_vmem [thread:$0]  %s327, 128, %s330, %s315
        $region20: #{tpu_custom_call.1} parent=15 // pred_fallthru
          _
        // Predicated region
        $region21: #{tpu_custom_call.1} parent=15 // pred_check
          %p333 = pneg %p106
        $region22: #{tpu_custom_call.1} parent=15 // pred_check_branch
          %335 = sbr.rel (%p333) target = $region24
        $region23: #{tpu_custom_call.1} parent=15 // pred_region
          %s336 = sand.u32 %s29, 1
          %s337 = scalar_lea.sflag [#allocation7], %s336
          %s338 = sand.u32 %s96, 1
          %s339 = smul.addr %s338, 8
          %s340 = scalar_lea.vmem [#allocation6], %s339
          %s341 = smul.u32 %s36, 2
          %s342 = sadd.s32 %s341, %s38
          %s344 = ssub.s32 128, 128
          %345 = vsyncadd %s337, %s344
          %s346 = smul.addr %s37, 2
          %s347 = sadd.s32 %s342, %s346
          %s348 = smul.addr %s347, 128
          %s349 = scalar_lea.hbm %s1, %s348
          %s351 = sshll.u32 %s340, 4
          %s352 = int_to_ptr.vmem [resolvable:$true] %s351
          %354 = dma.hbm_to_vmem [thread:$0]  %s349, 128, %s352, %s337
        $region24: #{tpu_custom_call.1} parent=15 // pred_fallthru
          _
        // Predicated region
        $region25: #{tpu_custom_call.1} parent=15 // pred_check
          %p355 = pneg %p138
        $region26: #{tpu_custom_call.1} parent=15 // pred_check_branch
          %357 = sbr.rel (%p355) target = $region28
        $region27: #{tpu_custom_call.1} parent=15 // pred_region
          %s358 = sand.u32 %s29, 1
          %s359 = scalar_lea.sflag [#allocation7], %s358
          %s360 = sand.u32 %s128, 1
          %s361 = smul.addr %s360, 16
          %s362 = scalar_lea.vmem [#allocation8], %s361
          %s363 = smul.u32 %s36, 2
          %s364 = sadd.s32 %s363, %s38
          %s366 = ssub.s32 256, 256
          %367 = vsyncadd %s359, %s366
          %s368 = smul.addr %s37, 4
          %s369 = sadd.s32 %s364, %s368
          %s370 = smul.addr %s369, 128
          %s371 = scalar_lea.hbm %s2, %s370
          %s372 = sshll.u32 %s362, 4
          %s373 = int_to_ptr.vmem [resolvable:$true] %s372
          %378 = dma.hbm_to_vmem [thread:$0]  %s371, 256, %s373, %s359, 256, 128, 8
        $region28: #{tpu_custom_call.1} parent=15 // pred_fallthru
          _
        // Predicated region
        $region29: #{tpu_custom_call.1} parent=15 // pred_check
          %p379 = pneg %p170
        $region30: #{tpu_custom_call.1} parent=15 // pred_check_branch
          %381 = sbr.rel (%p379) target = $region32
        $region31: #{tpu_custom_call.1} parent=15 // pred_region
          %s382 = sand.u32 %s29, 1
          %s383 = scalar_lea.sflag [#allocation10], %s382
          %s384 = sand.u32 %s160, 1
          %s385 = smul.addr %s384, 8
          %s386 = scalar_lea.vmem [#allocation9], %s385
          %s387 = smul.u32 %s36, 2
          %s388 = sadd.s32 %s387, %s38
          %s390 = ssub.s32 128, 128
          %391 = vsyncadd %s383, %s390
          %s392 = smul.addr %s37, 2
          %s393 = sadd.s32 %s388, %s392
          %s394 = smul.addr %s393, 128
          %s395 = scalar_lea.hbm %s3, %s394
          %s397 = sshll.u32 %s386, 4
          %s398 = int_to_ptr.vmem [resolvable:$true] %s397
          %400 = dma.hbm_to_vmem [thread:$0]  %s395, 128, %s398, %s383
        $region32: #{tpu_custom_call.1} parent=15 // pred_fallthru
          _
        // Predicated region
        $region33: #{tpu_custom_call.1} parent=15 // pred_check
          %p401 = pneg %p202
        $region34: #{tpu_custom_call.1} parent=15 // pred_check_branch
          %403 = sbr.rel (%p401) target = $region36
        $region35: #{tpu_custom_call.1} parent=15 // pred_region
          %s404 = sand.u32 %s29, 1
          %s405 = scalar_lea.sflag [#allocation10], %s404
          %s406 = sand.u32 %s192, 1
          %s407 = smul.addr %s406, 8
          %s408 = scalar_lea.vmem [#allocation11], %s407
          %s409 = smul.u32 %s36, 2
          %s410 = sadd.s32 %s409, %s38
          %s412 = ssub.s32 128, 128
          %413 = vsyncadd %s405, %s412
          %s414 = smul.addr %s37, 2
          %s415 = sadd.s32 %s410, %s414
          %s416 = smul.addr %s415, 128
          %s417 = scalar_lea.hbm %s4, %s416
          %s419 = sshll.u32 %s408, 4
          %s420 = int_to_ptr.vmem [resolvable:$true] %s419
          %422 = dma.hbm_to_vmem [thread:$0]  %s417, 128, %s420, %s405
        $region36: #{tpu_custom_call.1} parent=15 // pred_fallthru
          _
      $region16: #{tpu_custom_call.1} parent=5 // pred_fallthru
        _
      %p423 = scmp.le.s32.totalorder 1, %s29
      %p424 = scmp.lt.s32.totalorder %s29, 5
      %p425 = pnand %p423, %p424
      %p426 = pneg %p425
      // Predicated region
      $region37: #{tpu_custom_call.1} parent=5 // pred_check
        _
      $region38: #{tpu_custom_call.1} parent=5 // pred_check_branch
        %428 = sbr.rel (%p425) target = $region40
      $region39: #{tpu_custom_call.1} parent=5 // pred_region
        %s429 = ssub.s32 %s29, 1
        %s430 = sand.u32 %s67, 1
        %s431 = scalar_lea.sflag [#allocation4], %s430
        %s432 = sand.u32 %s67, 1
        %s433 = smul.addr %s432, 8
        %s434 = scalar_lea.vmem [#allocation3], %s433
        // Predicated region
        $region41: #{tpu_custom_call.1} parent=39 // pred_check
          %p435 = pneg %p80
        $region42: #{tpu_custom_call.1} parent=39 // pred_check_branch
          %437 = sbr.rel (%p435) target = $region44
        $region43: #{tpu_custom_call.1} parent=39 // pred_region
          %438 = dma.done %s431, 128
        $region44: #{tpu_custom_call.1} parent=39 // pred_fallthru
          _
        %s439 = sand.u32 %s34, 1
        %s440 = scalar_lea.sflag [#allocation7], %s439
        %s441 = sand.u32 %s99, 1
        %s442 = smul.addr %s441, 8
        %s443 = scalar_lea.vmem [#allocation6], %s442
        // Predicated region
        $region45: #{tpu_custom_call.1} parent=39 // pred_check
          %p444 = pneg %p112
        $region46: #{tpu_custom_call.1} parent=39 // pred_check_branch
          %446 = sbr.rel (%p444) target = $region48
        $region47: #{tpu_custom_call.1} parent=39 // pred_region
          %447 = dma.done %s440, 128
        $region48: #{tpu_custom_call.1} parent=39 // pred_fallthru
          _
        %s448 = sand.u32 %s34, 1
        %s449 = scalar_lea.sflag [#allocation7], %s448
        %s450 = sand.u32 %s131, 1
        %s451 = smul.addr %s450, 16
        %s452 = scalar_lea.vmem [#allocation8], %s451
        // Predicated region
        $region49: #{tpu_custom_call.1} parent=39 // pred_check
          %p453 = pneg %p144
        $region50: #{tpu_custom_call.1} parent=39 // pred_check_branch
          %455 = sbr.rel (%p453) target = $region52
        $region51: #{tpu_custom_call.1} parent=39 // pred_region
          %456 = dma.done %s449, 256
        $region52: #{tpu_custom_call.1} parent=39 // pred_fallthru
          _
        %s457 = sand.u32 %s34, 1
        %s458 = scalar_lea.sflag [#allocation10], %s457
        %s459 = sand.u32 %s163, 1
        %s460 = smul.addr %s459, 8
        %s461 = scalar_lea.vmem [#allocation9], %s460
        // Predicated region
        $region53: #{tpu_custom_call.1} parent=39 // pred_check
          %p462 = pneg %p176
        $region54: #{tpu_custom_call.1} parent=39 // pred_check_branch
          %464 = sbr.rel (%p462) target = $region56
        $region55: #{tpu_custom_call.1} parent=39 // pred_region
          %465 = dma.done %s458, 128
        $region56: #{tpu_custom_call.1} parent=39 // pred_fallthru
          _
        %s466 = sand.u32 %s34, 1
        %s467 = scalar_lea.sflag [#allocation10], %s466
        %s468 = sand.u32 %s195, 1
        %s469 = smul.addr %s468, 8
        %s470 = scalar_lea.vmem [#allocation11], %s469
        // Predicated region
        $region57: #{tpu_custom_call.1} parent=39 // pred_check
          %p471 = pneg %p208
        $region58: #{tpu_custom_call.1} parent=39 // pred_check_branch
          %473 = sbr.rel (%p471) target = $region60
        $region59: #{tpu_custom_call.1} parent=39 // pred_region
          %474 = dma.done %s467, 128
        $region60: #{tpu_custom_call.1} parent=39 // pred_fallthru
          _
        %s475 = sand.u32 %s67, 1
        %s476 = scalar_lea.sflag [#allocation4], %s475
        %s477 = sand.u32 %s67, 1
        %s478 = smul.addr %s477, 8
        %s479 = scalar_lea.vmem [#allocation3], %s478
        %p480 = pneg %p80
        %p481 = pneg %p77
        %s482 = sand.u32 %s34, 1
        %s483 = scalar_lea.sflag [#allocation7], %s482
        %s484 = sand.u32 %s99, 1
        %s485 = smul.addr %s484, 8
        %s486 = scalar_lea.vmem [#allocation6], %s485
        %p487 = pneg %p112
        %p488 = pneg %p109
        %s489 = sand.u32 %s34, 1
        %s490 = scalar_lea.sflag [#allocation7], %s489
        %s491 = sand.u32 %s131, 1
        %s492 = smul.addr %s491, 16
        %s493 = scalar_lea.vmem [#allocation8], %s492
        %p494 = pneg %p144
        %p495 = pneg %p141
        %s496 = sand.u32 %s34, 1
        %s497 = scalar_lea.sflag [#allocation10], %s496
        %s498 = sand.u32 %s163, 1
        %s499 = smul.addr %s498, 8
        %s500 = scalar_lea.vmem [#allocation9], %s499
        %p501 = pneg %p176
        %p502 = pneg %p173
        %s503 = sand.u32 %s34, 1
        %s504 = scalar_lea.sflag [#allocation10], %s503
        %s505 = sand.u32 %s195, 1
        %s506 = smul.addr %s505, 8
        %s507 = scalar_lea.vmem [#allocation11], %s506
        %p508 = pneg %p208
        %p509 = pneg %p205
        %p510 = pneg %p236
        %p511 = pneg %p233
        %s512 = sand.u32 %s223, 1
        %s513 = scalar_lea.sflag [#allocation5], %s512
        %s514 = sand.u32 %s223, 1
        %s515 = smul.addr %s514, 8
        %s516 = scalar_lea.vmem [#allocation12], %s515
        %p517 = pneg %p264
        %p518 = pneg %p261
        %s519 = sand.u32 %s34, 1
        %s520 = scalar_lea.sflag [#allocation14], %s519
        %s521 = sand.u32 %s251, 1
        %s522 = smul.addr %s521, 16
        %s523 = scalar_lea.vmem [#allocation13], %s522
        %p524 = pneg %p292
        %p525 = pneg %p289
        %s526 = sand.u32 %s34, 1
        %s527 = scalar_lea.sflag [#allocation14], %s526
        %s528 = sand.u32 %s279, 1
        %s529 = smul.addr %s528, 16
        %s530 = scalar_lea.vmem [#allocation15], %s529
        %s531 = smul.u32 %s39, 2
        %s532 = sadd.s32 %s531, %s41
        %s533 = smul.u32 %s39, 2
        %s534 = sadd.s32 %s533, %s41
        %s535 = smul.u32 %s39, 2
        %s536 = sadd.s32 %s535, %s41
        %s537 = smul.u32 %s39, 2
        %s538 = sadd.s32 %s537, %s41
        %s539 = smul.u32 %s39, 2
        %s540 = sadd.s32 %s539, %s41
        %p541 = scmp.eq.s32.totalorder %s41, 0
        // Predicated region
        $region61: #{tpu_custom_call.1} parent=39 // pred_check
          %p542 = pneg %p541
        $region62: #{tpu_custom_call.1} parent=39 // pred_check_branch
          %544 = sbr.rel (%p542) target = $region64
        $region63: #{tpu_custom_call.1} parent=39 // pred_region
          %vm545 = vcmask 130048
          %546 = vst.msk [vmem:[%s516] sm:$0xff] %vm545, 0.0
          %547 = vst.msk [vmem:[%s523] sm:$0xff] %vm545, 0.0
          %548 = vst.msk [vmem:[%s523 + $0x8] sm:$0xff] %vm545, 0.0
          %549 = vst.msk [vmem:[%s530] sm:$0xff] %vm545, 0.0
          %550 = vst.msk [vmem:[%s530 + $0x8] sm:$0xff] %vm545, 0.0
        $region64: #{tpu_custom_call.1} parent=39 // pred_fallthru
          _
        %v551 = vld [vmem:[%s434] sm:$0xff]
        %v552 = vld [vmem:[%s443] sm:$0xff]
        %v553 = vsub.f32 %v551, %v552
        %v554 = vmul.f32 %v553, %v553
        %v555 = vadd.f32 %v554, 0.0
        %v556 = vld [vmem:[%s516] sm:$0xff]
        %v557 = vadd.f32 %v556, %v555
        %vm558 = vcmask 130048
        %559 = vst.msk [vmem:[%s516] sm:$0xff] %vm558, %v557
        %v560 = vld [vmem:[%s452] sm:$0xff]
        %v561 = vld [vmem:[%s452 + $0x8] sm:$0xff]
        %564 = vrot.lane.b32.xlu0 %v560, 1
        %v565 = vpop.permute.xlu0 %564
        %566 = vrot.lane.b32.xlu0 %v561, 1
        %v567 = vpop.permute.xlu0 %566
        %v570 = vsub.f32 %v560, %v565
        %v571 = vsub.f32 %v561, %v567
        %v572 = vmul.f32 %v570, %v570
        %v573 = vmul.f32 %v571, %v571
        %vm574 = vcmask 130056
        %v575 = vsel %vm574, %v572, 0.0
        %v576 = vsel %vm574, %v573, 0.0
        %v577 = vadd.f32 %v575, %v576
        %v578 = vld [vmem:[%s523] sm:$0xff]
        %580 = vrot.lane.b32.xlu0 %v577, 127
        %v581 = vpop.permute.xlu0 %580
        %v583 = vadd.f32 %v578, %v581
        %vm584 = vcmask 121856
        %585 = vst.msk [vmem:[%s523] sm:$0xff] %vm584, %v583
        %v586 = vrot.slane %v560, 7
        %v587 = vrot.slane %v561, 7
        %v590 = vsub.f32 %v560, %v586
        %v591 = vsub.f32 %v561, %v587
        %v592 = vmul.f32 %v590, %v590
        %v593 = vmul.f32 %v591, %v591
        %vm594 = vcmask 130049
        %v595 = vsel %vm594, %v592, 0.0
        %v596 = vsel %vm594, %v593, 0.0
        %v597 = vadd.f32 %v595, %v596
        %v599 = vrot.slane %v597, 1
        %vm601 = vcmask 129024
        %v602 = vsel %vm601, %v599, 0.0
        %v603 = vrot.slane %v602, 4
        %v604 = vadd.f32 %v602, %v603
        %v605 = vrot.slane %v604, 2
        %v606 = vadd.f32 %v604, %v605
        %v607 = vrot.slane %v606, 1
        %v608 = vadd.f32 %v606, %v607
        %v609 = vld [vmem:[%s523 + $0x8] sm:$0x1]
        %v610 = vadd.f32 %v609, %v608
        %vm611 = vcmask 122880
        %612 = vst.msk [vmem:[%s523 + $0x8] sm:$0x1] %vm611, %v610
        %p613 = scmp.gt.s32.totalorder %s41, 0
        // Predicated region
        $region65: #{tpu_custom_call.1} parent=39 // pred_check
          %p614 = pneg %p613
        $region66: #{tpu_custom_call.1} parent=39 // pred_check_branch
          %616 = sbr.rel (%p614) target = $region68
        $region67: #{tpu_custom_call.1} parent=39 // pred_region
          %v617 = vld [vmem:[#allocation2] sm:$0x1]
          %v618 = vld [vmem:[#allocation2 + $0x1] sm:$0x1]
          %v619 = vsub.f32 %v560, %v617
          %v620 = vsub.f32 %v561, %v618
          %v621 = vmul.f32 %v619, %v619
          %v622 = vmul.f32 %v620, %v620
          %v623 = vsel %vm611, %v621, 0.0
          %v624 = vsel %vm611, %v622, 0.0
          %v625 = vadd.f32 %v623, %v624
          %v626 = vld [vmem:[%s523 + $0xf] sm:$0x1]
          %v627 = vadd.f32 %v626, %v625
          %628 = vst.msk [vmem:[%s523 + $0xf] sm:$0x1] %vm611, %v627
        $region68: #{tpu_custom_call.1} parent=39 // pred_fallthru
          _
        %vm629 = vcmask 130055
        %630 = vst.msk [vmem:[#allocation2 - $0x7] sm:$0x80] %vm629, %v560
        %631 = vst.msk [vmem:[#allocation2 - $0x6] sm:$0x80] %vm629, %v561
        %v632 = vld [vmem:[%s461] sm:$0xff]
        %v633 = vld [vmem:[%s470] sm:$0xff]
        %v634 = vmul.f32 %v632, %v633
        %v635 = vadd.f32 %v634, 0.0
        %v636 = vadd.f32 %v632, %v633
        %v637 = vadd.f32 %v636, 0.0
        %v638 = vld [vmem:[%s530] sm:$0xff]
        %v639 = vadd.f32 %v638, %v635
        %640 = vst.msk [vmem:[%s530] sm:$0xff] %vm558, %v639
        %s641 = scalar_lea.vmem %s530, 8 [#allocation15]
        %v642 = vld [vmem:[%s641] sm:$0xff]
        %v643 = vadd.f32 %v642, %v637
        %644 = vst.msk [vmem:[%s641] sm:$0xff] %vm558, %v643
        %s645 = sand.u32 %s223, 1
        %s646 = scalar_lea.sflag [#allocation5], %s645
        %s647 = sand.u32 %s223, 1
        %s648 = smul.addr %s647, 8
        %s649 = scalar_lea.vmem [#allocation12], %s648
        %s650 = sand.u32 %s34, 1
        %s651 = scalar_lea.sflag [#allocation14], %s650
        %s652 = sand.u32 %s251, 1
        %s653 = smul.addr %s652, 16
        %s654 = scalar_lea.vmem [#allocation13], %s653
        %s655 = sand.u32 %s34, 1
        %s656 = scalar_lea.sflag [#allocation14], %s655
        %s657 = sand.u32 %s279, 1
        %s658 = smul.addr %s657, 16
        %s659 = scalar_lea.vmem [#allocation15], %s658
        // Predicated region
        $region69: #{tpu_custom_call.1} parent=39 // pred_check
          %p660 = pneg %p233
        $region70: #{tpu_custom_call.1} parent=39 // pred_check_branch
          %662 = sbr.rel (%p660) target = $region72
        $region71: #{tpu_custom_call.1} parent=39 // pred_region
          %s664 = ssub.s32 128, 128
          %665 = vsyncadd %s646, %s664
          %s666 = smul.addr %s39, 2
          %s667 = sadd.s32 %s40, %s666
          %s668 = smul.addr %s667, 128
          %s669 = scalar_lea.hbm %s5, %s668
          %s671 = sshll.u32 %s649, 4
          %s672 = int_to_ptr.vmem [resolvable:$true] %s671
          %674 = dma.vmem_to_hbm [thread:$0]  %s672, 128, %s669, %s646
        $region72: #{tpu_custom_call.1} parent=39 // pred_fallthru
          _
        // Predicated region
        $region73: #{tpu_custom_call.1} parent=39 // pred_check
          %p675 = pneg %p261
        $region74: #{tpu_custom_call.1} parent=39 // pred_check_branch
          %677 = sbr.rel (%p675) target = $region76
        $region75: #{tpu_custom_call.1} parent=39 // pred_region
          %s679 = ssub.s32 256, 256
          %680 = vsyncadd %s651, %s679
          %s681 = smul.addr %s40, 2
          %s682 = smul.addr %s39, 4
          %s683 = sadd.s32 %s681, %s682
          %s684 = smul.addr %s683, 128
          %s685 = scalar_lea.hbm %s6, %s684
          %s686 = sshll.u32 %s654, 4
          %s687 = int_to_ptr.vmem [resolvable:$true] %s686
          %692 = dma.vmem_to_hbm [thread:$0]  %s687, 256, %s685, %s651, 128, 128, 8
        $region76: #{tpu_custom_call.1} parent=39 // pred_fallthru
          _
        // Predicated region
        $region77: #{tpu_custom_call.1} parent=39 // pred_check
          %p693 = pneg %p289
        $region78: #{tpu_custom_call.1} parent=39 // pred_check_branch
          %695 = sbr.rel (%p693) target = $region80
        $region79: #{tpu_custom_call.1} parent=39 // pred_region
          %s697 = ssub.s32 256, 256
          %698 = vsyncadd %s656, %s697
          %s699 = smul.addr %s40, 2
          %s700 = smul.addr %s39, 4
          %s701 = sadd.s32 %s699, %s700
          %s702 = smul.addr %s701, 128
          %s703 = scalar_lea.hbm %s7, %s702
          %s704 = sshll.u32 %s659, 4
          %s705 = int_to_ptr.vmem [resolvable:$true] %s704
          %710 = dma.vmem_to_hbm [thread:$0]  %s705, 256, %s703, %s656, 128, 128, 8
        $region80: #{tpu_custom_call.1} parent=39 // pred_fallthru
          _
      $region40: #{tpu_custom_call.1} parent=5 // pred_fallthru
        _
      %p711 = scmp.le.s32.totalorder 2, %s29
      // Predicated region
      $region81: #{tpu_custom_call.1} parent=5 // pred_check
        %p712 = pneg %p711
      $region82: #{tpu_custom_call.1} parent=5 // pred_check_branch
        %714 = sbr.rel (%p712) target = $region84
      $region83: #{tpu_custom_call.1} parent=5 // pred_region
        %s715 = ssub.s32 %s29, 2
        // Predicated region
        $region85: #{tpu_custom_call.1} parent=83 // pred_check
          %p716 = pneg %p239
        $region86: #{tpu_custom_call.1} parent=83 // pred_check_branch
          %718 = sbr.rel (%p716) target = $region88
        $region87: #{tpu_custom_call.1} parent=83 // pred_region
          %s719 = sand.u32 %s224, 1
          %s720 = scalar_lea.sflag [#allocation5], %s719
          %s721 = sand.u32 %s224, 1
          %s722 = smul.addr %s721, 8
          %s723 = scalar_lea.vmem [#allocation12], %s722
          %724 = dma.done %s720, 128
        $region88: #{tpu_custom_call.1} parent=83 // pred_fallthru
          _
        // Predicated region
        $region89: #{tpu_custom_call.1} parent=83 // pred_check
          %p725 = pneg %p267
        $region90: #{tpu_custom_call.1} parent=83 // pred_check_branch
          %727 = sbr.rel (%p725) target = $region92
        $region91: #{tpu_custom_call.1} parent=83 // pred_region
          %s728 = sand.u32 %s35, 1
          %s729 = scalar_lea.sflag [#allocation14], %s728
          %s730 = sand.u32 %s252, 1
          %s731 = smul.addr %s730, 16
          %s732 = scalar_lea.vmem [#allocation13], %s731
          %733 = dma.done %s729, 256
        $region92: #{tpu_custom_call.1} parent=83 // pred_fallthru
          _
        // Predicated region
        $region93: #{tpu_custom_call.1} parent=83 // pred_check
          %p734 = pneg %p295
        $region94: #{tpu_custom_call.1} parent=83 // pred_check_branch
          %736 = sbr.rel (%p734) target = $region96
        $region95: #{tpu_custom_call.1} parent=83 // pred_region
          %s737 = sand.u32 %s35, 1
          %s738 = scalar_lea.sflag [#allocation14], %s737
          %s739 = sand.u32 %s280, 1
          %s740 = smul.addr %s739, 16
          %s741 = scalar_lea.vmem [#allocation15], %s740
          %742 = dma.done %s738, 256
        $region96: #{tpu_custom_call.1} parent=83 // pred_fallthru
          _
      $region84: #{tpu_custom_call.1} parent=5 // pred_fallthru
        _
    $region6: #{tpu_custom_call.1} parent=1 // loop_footer
      %s33 = sadd.s32 1, %s29
    $region7: #{tpu_custom_call.1} parent=1 // loop_footer_branch
      %28 = sbr.rel target = $region3
    $region8: #{tpu_custom_call.1} parent=1 // loop_exit
      _
    %743 = vsyncpa [#allocation4], 1
    %s744 = scalar_lea.sflag [#allocation4], 1
    %745 = vsyncpa %s744, 1
    %746 = vsyncpa [#allocation7], 1
    %s747 = scalar_lea.sflag [#allocation7], 1
    %748 = vsyncpa %s747, 1
    %749 = vsyncpa [#allocation10], 1
    %s750 = scalar_lea.sflag [#allocation10], 1
    %751 = vsyncpa %s750, 1
    %752 = vsyncpa [#allocation5], 1
    %s753 = scalar_lea.sflag [#allocation5], 1
    %754 = vsyncpa %s753, 1
    %755 = vsyncpa [#allocation14], 1
    %s756 = scalar_lea.sflag [#allocation14], 1
    %757 = vsyncpa %s756, 1

</llo_original>
